<compile_context>
chip_gen: v7x
topology: tpu7x:2x2x1
jax: 0.10.0
libtpu: 0.0.40
codegen_flags: <defaults>
</compile_context>

<pallas_src>
import jax
import jax.numpy as jnp
from jax.experimental import pallas as pl
from jax.experimental.pallas import tpu as pltpu


def _round_up(x, m):
    return (x + m - 1) // m * m


# ---------------------------------------------------------------------------
# Pass 1: dense projection + fused attention-score selectors.
#   xp = x @ W                      [TM, H*C]
#   a  = xp @ [S_src | S_dst]       [TM, 2H]   (cols 0..H-1 = src, H..2H-1 = dst)
# ---------------------------------------------------------------------------
def _project_kernel(x_ref, w_ref, sel_ref, xp_ref, a_ref):
    xp = jnp.dot(x_ref[...], w_ref[...], preferred_element_type=jnp.float32)
    xp_ref[...] = xp
    a_ref[...] = jnp.dot(xp, sel_ref[...], preferred_element_type=jnp.float32)


# ---------------------------------------------------------------------------
# Pass 2: masked-softmax attention + aggregation (+ bias, activation, residual).
# ---------------------------------------------------------------------------
def _attn_body(adj_ref, xp_ref, a_ref, bias_ref, out_ref, acc_ref, *,
               heads, ch, tm, residual):
    neg = jnp.float32(0.2)
    off = pl.multiple_of(pl.program_id(0) * tm, tm)

    mask = adj_ref[...] > 0                            # (tm, Np) bool, adj shipped as int8
    xp = xp_ref[...]                                   # (Np, heads*ch) resident
    a_src_t = jnp.transpose(a_ref[...][:, :heads])     # (heads, Np)
    a_dst = a_ref[pl.ds(off, tm), :][:, heads:]        # (tm, heads) for this dst tile

    for h in range(heads):                             # static unroll (heads <= 4)
        e = a_dst[:, h:h + 1] + a_src_t[h:h + 1, :]    # (tm, Np)
        e = jnp.where(e > 0, e, neg * e)               # leaky_relu(0.2)
        e = jnp.where(mask, e, jnp.float32(-1e30))     # single mask pass
        e = e - jnp.max(e, axis=1, keepdims=True)
        p = jnp.exp(e)                                 # masked entries underflow to 0
        # rowsum >= exp(0) == 1 always, so no 0/0 even for fully padded rows.
        inv = pl.reciprocal(jnp.sum(p, axis=1, keepdims=True), approx=True)
        acc_ref[:, h * ch:(h + 1) * ch] = jnp.dot(
            p * inv, xp[:, h * ch:(h + 1) * ch],
            preferred_element_type=jnp.float32)

    out = acc_ref[...] + bias_ref[...]                 # GATConv bias
    out = jnp.where(out > 0, out, neg * out)           # module activation LeakyReLU(0.2)
    if residual is not None:
        out = out + residual
    out_ref[...] = out


def _make_attn_kernel(*, heads, ch, tm, with_residual):
    if with_residual:
        def kernel(adj_ref, xp_ref, a_ref, bias_ref, x_ref, wr_ref, br_ref,
                   out_ref, acc_ref):
            res = jnp.dot(x_ref[...], wr_ref[...],
                          preferred_element_type=jnp.float32) + br_ref[...]
            _attn_body(adj_ref, xp_ref, a_ref, bias_ref, out_ref, acc_ref,
                       heads=heads, ch=ch, tm=tm, residual=res)
    else:
        def kernel(adj_ref, xp_ref, a_ref, bias_ref, out_ref, acc_ref):
            _attn_body(adj_ref, xp_ref, a_ref, bias_ref, out_ref, acc_ref,
                       heads=heads, ch=ch, tm=tm, residual=None)
    return kernel


# ---------------------------------------------------------------------------
# One GAT layer = projection call + attention call (both tiled over dst nodes).
# ---------------------------------------------------------------------------
def _gat_layer(x, adj_i8, w, sel, bias, *, heads, ch, tm,
               residual_in=None, wr=None, br=None):
    n_pad, fin = x.shape
    hc = heads * ch
    grid = (n_pad // tm,)
    cparams = pltpu.CompilerParams(
        dimension_semantics=("parallel",),
        vmem_limit_bytes=32 * 1024 * 1024)

    # ---- pass 1: xp = x @ W, a = xp @ [S_src | S_dst] ----------------------
    xp, a = pl.pallas_call(
        _project_kernel,
        out_shape=(jax.ShapeDtypeStruct((n_pad, hc), jnp.float32),
                   jax.ShapeDtypeStruct((n_pad, 2 * heads), jnp.float32)),
        grid=grid,
        in_specs=[pl.BlockSpec((tm, fin), lambda i: (i, 0)),
                  pl.BlockSpec(w.shape, lambda i: (0, 0)),
                  pl.BlockSpec(sel.shape, lambda i: (0, 0))],
        out_specs=(pl.BlockSpec((tm, hc), lambda i: (i, 0)),
                   pl.BlockSpec((tm, 2 * heads), lambda i: (i, 0))),
        compiler_params=cparams,
    )(x, w, sel)

    # ---- pass 2: masked softmax attention + aggregation --------------------
    with_res = residual_in is not None
    kernel = _make_attn_kernel(heads=heads, ch=ch, tm=tm, with_residual=with_res)

    in_arrays = [adj_i8, xp, a, bias]
    in_specs = [pl.BlockSpec((tm, n_pad), lambda i: (i, 0)),        # adj dst tiles (int8)
                pl.BlockSpec((n_pad, hc), lambda i: (0, 0)),        # xp resident
                pl.BlockSpec((n_pad, 2 * heads), lambda i: (0, 0)),  # scores resident
                pl.BlockSpec(bias.shape, lambda i: (0, 0))]
    if with_res:
        in_arrays += [residual_in, wr, br]
        in_specs += [pl.BlockSpec((tm, residual_in.shape[1]), lambda i: (i, 0)),
                     pl.BlockSpec(wr.shape, lambda i: (0, 0)),
                     pl.BlockSpec(br.shape, lambda i: (0, 0))]

    cost = pl.CostEstimate(
        flops=int(2 * n_pad * n_pad * hc + 12 * heads * n_pad * n_pad),
        transcendentals=int(heads * n_pad * n_pad),
        bytes_accessed=int(n_pad * n_pad + 8 * n_pad * hc))

    out = pl.pallas_call(
        kernel,
        out_shape=jax.ShapeDtypeStruct((n_pad, hc), jnp.float32),
        grid=grid,
        in_specs=in_specs,
        out_specs=pl.BlockSpec((tm, hc), lambda i: (i, 0)),
        scratch_shapes=[pltpu.VMEM((tm, hc), jnp.float32)],
        compiler_params=cparams,
        cost_estimate=cost,
    )(*in_arrays)
    return out


# ---------------------------------------------------------------------------
# Full module forward (glue): padding, layer chaining, final slice.
# ---------------------------------------------------------------------------
def multilayer_gat_forward(features, adj, params, *, heads, hidden, out_dim):
    """features [N, in_dim] f32; adj [N, N], adj[i, j] != 0 iff edge j -> i."""
    n, _ = features.shape
    n_pad = _round_up(max(n, 1), 128)
    tm = 128 if n_pad >= 256 else 64          # >=2 grid steps even at n_pad == 128

    x = jnp.pad(features.astype(jnp.float32), ((0, n_pad - n), (0, 0)))
    adj_i8 = jnp.pad((adj > 0).astype(jnp.int8),
                     ((0, n_pad - n), (0, n_pad - n)))

    (w1, sel1, b1, w2, sel2, b2, wr, br) = params

    h1 = _gat_layer(x, adj_i8, w1, sel1, b1, heads=heads, ch=hidden, tm=tm)
    out = _gat_layer(h1, adj_i8, w2, sel2, b2, heads=1, ch=out_dim, tm=tm,
                     residual_in=x, wr=wr, br=br)
    return out[:n]


# ---------------------------------------------------------------------------
# Parameter helpers + pure-JAX reference (host-side glue only).
# ---------------------------------------------------------------------------
def _fused_selector(att_src, att_dst):
    """[H,C] x2 -> [H*C, 2H] block-diag selector; xp @ S gives [a_src | a_dst]."""
    h_n, c_n = att_src.shape
    s = jnp.zeros((h_n * c_n, 2 * h_n), jnp.float32)
    for h in range(h_n):
        s = s.at[h * c_n:(h + 1) * c_n, h].set(att_src[h])
        s = s.at[h * c_n:(h + 1) * c_n, h_n + h].set(att_dst[h])
    return s


def _reference(features, adj, w1, as1, ad1, b1, w2, as2, ad2, b2, wr, br,
               *, heads, hidden, out_dim):
    def leaky(v):
        return jnp.where(v > 0, v, 0.2 * v)

    def gat(x, w, a_s, a_d, b, H, C):
        xp = x @ w
        xph = xp.reshape(-1, H, C)
        asrc = jnp.einsum('nhc,hc->nh', xph, a_s)
        adst = jnp.einsum('nhc,hc->nh', xph, a_d)
        e = leaky(adst[:, None, :] + asrc[None, :, :])          # [dst, src, H]
        e = jnp.where(adj[:, :, None] > 0, e, -jnp.inf)
        attn = jax.nn.softmax(e, axis=1)
        return jnp.einsum('ijh,jhc->ihc', attn, xph).reshape(-1, H * C) + b

    h1 = leaky(gat(features, w1, as1, ad1, b1, heads, hidden))
    h2 = leaky(gat(h1, w2, as2, ad2, b2, 1, out_dim))
    return h2 + (features @ wr + br)


if __name__ == "__main__":
    N, IN_DIM, HIDDEN, HEADS, OUT_DIM = 16, 8, 8, 4, 16   # in_dim != out_dim -> residual Linear

    key = jax.random.PRNGKey(0)
    keys = jax.random.split(key, 10)

    features = jax.random.normal(keys[0], (N, IN_DIM), jnp.float32)

    # Deterministic bidirectional ring graph; adj[dst, src] + self loops.
    src = jnp.concatenate([jnp.arange(N), (jnp.arange(N) + 1) % N])
    dst = jnp.concatenate([(jnp.arange(N) + 1) % N, jnp.arange(N)])
    adj = jnp.zeros((N, N), jnp.float32)
    adj = adj.at[dst, src].set(1.0)
    adj = adj.at[jnp.arange(N), jnp.arange(N)].set(1.0)

    scale = 0.1
    w1 = scale * jax.random.normal(keys[1], (IN_DIM, HEADS * HIDDEN), jnp.float32)
    att_src1 = scale * jax.random.normal(keys[2], (HEADS, HIDDEN), jnp.float32)
    att_dst1 = scale * jax.random.normal(keys[3], (HEADS, HIDDEN), jnp.float32)
    b1 = scale * jax.random.normal(keys[4], (1, HEADS * HIDDEN), jnp.float32)
    w2 = scale * jax.random.normal(keys[5], (HEADS * HIDDEN, OUT_DIM), jnp.float32)
    att_src2 = scale * jax.random.normal(keys[6], (1, OUT_DIM), jnp.float32)
    att_dst2 = scale * jax.random.normal(keys[7], (1, OUT_DIM), jnp.float32)
    b2 = jnp.zeros((1, OUT_DIM), jnp.float32)
    wr = scale * jax.random.normal(keys[8], (IN_DIM, OUT_DIM), jnp.float32)
    br = scale * jax.random.normal(keys[9], (1, OUT_DIM), jnp.float32)

    params = (w1, _fused_selector(att_src1, att_dst1), b1,
              w2, _fused_selector(att_src2, att_dst2), b2,
              wr, br)

    out = multilayer_gat_forward(features, adj, params,
                                 heads=HEADS, hidden=HIDDEN, out_dim=OUT_DIM)
    out = jax.block_until_ready(out)
    assert out.shape == (N, OUT_DIM)

    ref = _reference(features, adj, w1, att_src1, att_dst1, b1,
                     w2, att_src2, att_dst2, b2, wr, br,
                     heads=HEADS, hidden=HIDDEN, out_dim=OUT_DIM)
    assert jnp.allclose(out, ref, rtol=2e-2, atol=2e-2), \
        float(jnp.max(jnp.abs(out - ref)))
    print("KERNEL_OK")
</pallas_src>

<mosaic_0001>
module attributes {stable_mosaic.version = 11 : i64} {
  func.func @_project_kernel(%arg0: i32, %arg1: memref<64x8xf32, #tpu.memory_space<vmem>>, %arg2: memref<8x32xf32, #tpu.memory_space<vmem>>, %arg3: memref<32x8xf32, #tpu.memory_space<vmem>>, %arg4: memref<64x32xf32, #tpu.memory_space<vmem>>, %arg5: memref<64x8xf32, #tpu.memory_space<vmem>>) attributes {dimension_semantics = [#tpu.dimension_semantics<parallel>], iteration_bounds = array<i64: 2>, scalar_prefetch = 0 : i64, scratch_operands = 0 : i64, tpu.core_type = #tpu.core_type<tc>, window_params = [{transform_indices = @transform_0, window_bounds = array<i64: 64, 8>}, {pipeline_mode = #tpu.pipeline_mode<synchronous>, transform_indices = @transform_1, window_bounds = array<i64: 8, 32>}, {pipeline_mode = #tpu.pipeline_mode<synchronous>, transform_indices = @transform_2, window_bounds = array<i64: 32, 8>}, {transform_indices = @transform_3, window_bounds = array<i64: 64, 32>}, {transform_indices = @transform_4, window_bounds = array<i64: 64, 8>}]} {
    %c0 = arith.constant 0 : index
    %c0_0 = arith.constant 0 : index
    %0 = vector.load %arg1[%c0, %c0_0] : memref<64x8xf32, #tpu.memory_space<vmem>>, vector<64x8xf32>
    %c0_1 = arith.constant 0 : index
    %c0_2 = arith.constant 0 : index
    %1 = vector.load %arg2[%c0_1, %c0_2] : memref<8x32xf32, #tpu.memory_space<vmem>>, vector<8x32xf32>
    %cst = arith.constant dense<0.000000e+00> : vector<64x32xf32>
    %2 = tpu.matmul %0, %1, %cst {dimension_numbers = #tpu.dot_dimension_numbers<[1], [0], [0], [1], [0, 0, 1, 1], [], []>} : vector<64x8xf32>, vector<8x32xf32>, vector<64x32xf32> -> vector<64x32xf32>
    %c0_3 = arith.constant 0 : index
    %c0_4 = arith.constant 0 : index
    %3 = vector.load %arg4[%c0_3, %c0_4] : memref<64x32xf32, #tpu.memory_space<vmem>>, vector<64x32xf32>
    tpu.vector_store %arg4[%c0_3, %c0_4], %2 {strides = array<i32>} : memref<64x32xf32, #tpu.memory_space<vmem>>, vector<64x32xf32>,
    %c0_5 = arith.constant 0 : index
    %c0_6 = arith.constant 0 : index
    %4 = vector.load %arg3[%c0_5, %c0_6] : memref<32x8xf32, #tpu.memory_space<vmem>>, vector<32x8xf32>
    %cst_7 = arith.constant dense<0.000000e+00> : vector<64x8xf32>
    %5 = tpu.matmul %2, %4, %cst_7 {dimension_numbers = #tpu.dot_dimension_numbers<[1], [0], [0], [1], [0, 0, 1, 1], [], []>} : vector<64x32xf32>, vector<32x8xf32>, vector<64x8xf32> -> vector<64x8xf32>
    %c0_8 = arith.constant 0 : index
    %c0_9 = arith.constant 0 : index
    %6 = vector.load %arg5[%c0_8, %c0_9] : memref<64x8xf32, #tpu.memory_space<vmem>>, vector<64x8xf32>
    tpu.vector_store %arg5[%c0_8, %c0_9], %5 {strides = array<i32>} : memref<64x8xf32, #tpu.memory_space<vmem>>, vector<64x8xf32>,
    return
  }
  func.func @transform_0(%arg0: i32) -> (i32, i32) {
    %c0_i32 = arith.constant 0 : i32
    %c0_i32_0 = arith.constant 0 : i32
    return %arg0, %c0_i32 : i32, i32
  }
  func.func @transform_1(%arg0: i32) -> (i32, i32) {
    %c0_i32 = arith.constant 0 : i32
    %c0_i32_0 = arith.constant 0 : i32
    %c0_i32_1 = arith.constant 0 : i32
    return %c0_i32, %c0_i32_0 : i32, i32
  }
  func.func @transform_2(%arg0: i32) -> (i32, i32) {
    %c0_i32 = arith.constant 0 : i32
    %c0_i32_0 = arith.constant 0 : i32
    %c0_i32_1 = arith.constant 0 : i32
    return %c0_i32, %c0_i32_0 : i32, i32
  }
  func.func @transform_3(%arg0: i32) -> (i32, i32) {
    %c0_i32 = arith.constant 0 : i32
    %c0_i32_0 = arith.constant 0 : i32
    return %arg0, %c0_i32 : i32, i32
  }
  func.func @transform_4(%arg0: i32) -> (i32, i32) {
    %c0_i32 = arith.constant 0 : i32
    %c0_i32_0 = arith.constant 0 : i32
    return %arg0, %c0_i32 : i32, i32
  }
}

</mosaic_0001>

<llo_original>
// kernel: tpu_custom_call.1
$region0: #{tpu_custom_call.1}
  #allocation0 [shape = 'u32[]', space=smem, size = 0x4, offset = 0x4, fixed_abs, tag = 'smem constant byte address 0x4 - core index']
  #allocation1 [shape = 'u32[144,128]{1,0:T(1,128)}', space=vmem, size = 0x12000, scoped, tag = 'internal scratch']
  %s0 = inlined_call_operand.vmem [shape: f32[128,8], index: 0, kind: input, shape index: {}]
  %s1 = inlined_call_operand.vmem [shape: f32[8,32], index: 1, kind: input, shape index: {}]
  %s2 = inlined_call_operand.vmem [shape: f32[32,8], index: 2, kind: input, shape index: {}]
  %s3 = inlined_call_operand.vmem [shape: f32[128,32], index: 3, kind: output, shape index: {0}]
  %s4 = inlined_call_operand.vmem [shape: f32[128,8], index: 4, kind: output, shape index: {1}]
  %5 = xla_tuple %s3, %s4
  %s6 = sld [smem:[#allocation0]]
  $region53: #{tpu_custom_call.1} parent=0
    _
  %s8 = ssub.s32 1, %s6
  %s9 = scalar_select 0, %s8, %s6
  loop: start=0, step=1, limit=4
  $region2: #{tpu_custom_call.1} parent=0 // loop_pre_header
    _
  $region3: #{tpu_custom_call.1} parent=0 // loop_header
    %s11 = sphi 0, %s15
    %p12 = scmp.ge.s32.totalorder %s11, 4
    %s21 = sphi 0, %s23
    %s24 = sphi 0, %s21
    %s25 = sphi 0, %s24
    %s41 = sphi 0, %s25
    %s45 = sphi 0, %s45
    %s47 = sphi 0, %s45
    %s48 = sphi 0, %s47
    %s62 = sphi 0, %s48
    %s66 = sphi 0, %s66
    %s68 = sphi 0, %s66
    %s69 = sphi 0, %s68
    %s83 = sphi 0, %s69
    %s89 = sphi 0, %s91
    %s92 = sphi 0, %s89
    %s93 = sphi 0, %s92
    %s109 = sphi 0, %s93
    %s115 = sphi 0, %s117
    %s118 = sphi 0, %s115
    %s119 = sphi 0, %s118
    %s135 = sphi 0, %s119
  $region4: #{tpu_custom_call.1} parent=0 // loop_header_branch
    %14 = sbr.rel (%p12) target = $region8
  $region5: #{tpu_custom_call.1} parent=0 // loop_body
    %s16 = ssub.s32 %s11, 1
    %s17 = ssub.s32 %s11, 2
    %s18 = sadd.s32 %s11, 1
    %s19 = ssub.s32 %s11, %s18
    %p20 = scmp.eq.s32.totalorder %s19, 0
    %s22 = sadd.s32 %s21, 1
    %s23 = scalar_select %p20, %s21, %s22
    %p26 = pneg %p20
    %p27 = scmp.eq.s32.totalorder %s11, 1
    %p28 = por %p26, %p27
    %p29 = scmp.ne.s32.totalorder %s21, %s24
    %p30 = scmp.eq.s32.totalorder %s11, 0
    %p31 = por %p29, %p30
    %p32 = scmp.ne.s32.totalorder %s21, %s24
    %p33 = scmp.eq.s32.totalorder %s16, 1
    %p34 = por %p32, %p33
    %p35 = scmp.ne.s32.totalorder %s24, %s25
    %p36 = scmp.eq.s32.totalorder %s16, 0
    %p37 = por %p35, %p36
    %p38 = scmp.ne.s32.totalorder %s24, %s25
    %p39 = scmp.eq.s32.totalorder %s17, 1
    %p40 = por %p38, %p39
    %p42 = scmp.ne.s32.totalorder %s25, %s41
    %p43 = scmp.eq.s32.totalorder %s17, 0
    %p44 = por %p42, %p43
    %s46 = sadd.s32 %s45, 1
    %p49 = scmp.eq.s32.totalorder %s11, 1
    %p50 = scmp.ne.s32.totalorder %s45, %s47
    %p51 = scmp.eq.s32.totalorder %s11, 0
    %p52 = por %p50, %p51
    %p53 = scmp.ne.s32.totalorder %s45, %s47
    %p54 = scmp.eq.s32.totalorder %s16, 1
    %p55 = por %p53, %p54
    %p56 = scmp.ne.s32.totalorder %s47, %s48
    %p57 = scmp.eq.s32.totalorder %s16, 0
    %p58 = por %p56, %p57
    %p59 = scmp.ne.s32.totalorder %s47, %s48
    %p60 = scmp.eq.s32.totalorder %s17, 1
    %p61 = por %p59, %p60
    %p63 = scmp.ne.s32.totalorder %s48, %s62
    %p64 = scmp.eq.s32.totalorder %s17, 0
    %p65 = por %p63, %p64
    %s67 = sadd.s32 %s66, 1
    %p70 = scmp.eq.s32.totalorder %s11, 1
    %p71 = scmp.ne.s32.totalorder %s66, %s68
    %p72 = scmp.eq.s32.totalorder %s11, 0
    %p73 = por %p71, %p72
    %p74 = scmp.ne.s32.totalorder %s66, %s68
    %p75 = scmp.eq.s32.totalorder %s16, 1
    %p76 = por %p74, %p75
    %p77 = scmp.ne.s32.totalorder %s68, %s69
    %p78 = scmp.eq.s32.totalorder %s16, 0
    %p79 = por %p77, %p78
    %p80 = scmp.ne.s32.totalorder %s68, %s69
    %p81 = scmp.eq.s32.totalorder %s17, 1
    %p82 = por %p80, %p81
    %p84 = scmp.ne.s32.totalorder %s69, %s83
    %p85 = scmp.eq.s32.totalorder %s17, 0
    %p86 = por %p84, %p85
    %s87 = ssub.s32 %s11, %s18
    %p88 = scmp.eq.s32.totalorder %s87, 0
    %s90 = sadd.s32 %s89, 1
    %s91 = scalar_select %p88, %s89, %s90
    %p94 = pneg %p88
    %p95 = scmp.eq.s32.totalorder %s11, 1
    %p96 = por %p94, %p95
    %p97 = scmp.ne.s32.totalorder %s89, %s92
    %p98 = scmp.eq.s32.totalorder %s11, 0
    %p99 = por %p97, %p98
    %p100 = scmp.ne.s32.totalorder %s89, %s92
    %p101 = scmp.eq.s32.totalorder %s16, 1
    %p102 = por %p100, %p101
    %p103 = scmp.ne.s32.totalorder %s92, %s93
    %p104 = scmp.eq.s32.totalorder %s16, 0
    %p105 = por %p103, %p104
    %p106 = scmp.ne.s32.totalorder %s92, %s93
    %p107 = scmp.eq.s32.totalorder %s17, 1
    %p108 = por %p106, %p107
    %p110 = scmp.ne.s32.totalorder %s93, %s109
    %p111 = scmp.eq.s32.totalorder %s17, 0
    %p112 = por %p110, %p111
    %s113 = ssub.s32 %s11, %s18
    %p114 = scmp.eq.s32.totalorder %s113, 0
    %s116 = sadd.s32 %s115, 1
    %s117 = scalar_select %p114, %s115, %s116
    %p120 = pneg %p114
    %p121 = scmp.eq.s32.totalorder %s11, 1
    %p122 = por %p120, %p121
    %p123 = scmp.ne.s32.totalorder %s115, %s118
    %p124 = scmp.eq.s32.totalorder %s11, 0
    %p125 = por %p123, %p124
    %p126 = scmp.ne.s32.totalorder %s115, %s118
    %p127 = scmp.eq.s32.totalorder %s16, 1
    %p128 = por %p126, %p127
    %p129 = scmp.ne.s32.totalorder %s118, %s119
    %p130 = scmp.eq.s32.totalorder %s16, 0
    %p131 = por %p129, %p130
    %p132 = scmp.ne.s32.totalorder %s118, %s119
    %p133 = scmp.eq.s32.totalorder %s17, 1
    %p134 = por %p132, %p133
    %p136 = scmp.ne.s32.totalorder %s119, %s135
    %p137 = scmp.eq.s32.totalorder %s17, 0
    %p138 = por %p136, %p137
    %p139 = scmp.le.s32.totalorder 1, %s11
    %p140 = scmp.lt.s32.totalorder %s11, 3
    %p141 = pnand %p139, %p140
    %p142 = pneg %p141
    // Predicated region
    $region9: #{tpu_custom_call.1} parent=5 // pred_check
      _
    $region10: #{tpu_custom_call.1} parent=5 // pred_check_branch
      %144 = sbr.rel (%p141) target = $region12
    $region11: #{tpu_custom_call.1} parent=5 // pred_region
      %s145 = ssub.s32 %s11, 1
      // Predicated region
      $region13: #{tpu_custom_call.1} parent=11 // pred_check
        %p146 = pneg %p58
      $region14: #{tpu_custom_call.1} parent=11 // pred_check_branch
        %148 = sbr.rel (%p146) target = $region16
      $region15: #{tpu_custom_call.1} parent=11 // pred_region
        _
      $region16: #{tpu_custom_call.1} parent=11 // pred_fallthru
        _
      // Predicated region
      $region17: #{tpu_custom_call.1} parent=11 // pred_check
        %p149 = pneg %p79
      $region18: #{tpu_custom_call.1} parent=11 // pred_check_branch
        %151 = sbr.rel (%p149) target = $region20
      $region19: #{tpu_custom_call.1} parent=11 // pred_region
        _
      $region20: #{tpu_custom_call.1} parent=11 // pred_fallthru
        _
    $region12: #{tpu_custom_call.1} parent=5 // pred_fallthru
      _
    %p152 = scmp.lt.s32.totalorder %s11, 2
    // Predicated region
    $region21: #{tpu_custom_call.1} parent=5 // pred_check
      %p153 = pneg %p152
    $region22: #{tpu_custom_call.1} parent=5 // pred_check_branch
      %155 = sbr.rel (%p153) target = $region24
    $region23: #{tpu_custom_call.1} parent=5 // pred_region
      // Predicated region
      $region25: #{tpu_custom_call.1} parent=23 // pred_check
        %p156 = pneg %p31
      $region26: #{tpu_custom_call.1} parent=23 // pred_check_branch
        %158 = sbr.rel (%p156) target = $region28
      $region27: #{tpu_custom_call.1} parent=23 // pred_region
        %s159 = smul.u32 8, %s11
        %p160 = scmp.lt.s32.totalorder %s159, 15
        %s161 = scalar_select %p160, %s159, 15
        %s162 = smul.addr %s161, 8
        %s163 = scalar_lea.vmem %s0, %s162
        %s164 = smul.u32 8, %s11
      $region28: #{tpu_custom_call.1} parent=23 // pred_fallthru
        _
    $region24: #{tpu_custom_call.1} parent=5 // pred_fallthru
      _
    %p165 = scmp.le.s32.totalorder 1, %s11
    %p166 = scmp.lt.s32.totalorder %s11, 3
    %p167 = pnand %p165, %p166
    %p168 = pneg %p167
    // Predicated region
    $region29: #{tpu_custom_call.1} parent=5 // pred_check
      _
    $region30: #{tpu_custom_call.1} parent=5 // pred_check_branch
      %170 = sbr.rel (%p167) target = $region32
    $region31: #{tpu_custom_call.1} parent=5 // pred_region
      %s171 = ssub.s32 %s11, 1
      %s172 = smul.u32 8, %s16
      %p173 = scmp.lt.s32.totalorder %s172, 15
      %s174 = scalar_select %p173, %s172, 15
      %s175 = smul.addr %s174, 8
      %s176 = scalar_lea.vmem %s0, %s175
      %p177 = pneg %p37
      %p178 = pneg %p34
      %p179 = pneg %p58
      %p180 = pneg %p55
      %p181 = pneg %p79
      %p182 = pneg %p76
      %p183 = pneg %p105
      %p184 = pneg %p102
      %s185 = smul.u32 8, %s16
      %p186 = scmp.lt.s32.totalorder %s185, 15
      %s187 = scalar_select %p186, %s185, 15
      %s188 = smul.addr %s187, 8
      %s189 = scalar_lea.vmem %s3, %s188
      %p190 = pneg %p131
      %p191 = pneg %p128
      %s192 = smul.u32 8, %s16
      %p193 = scmp.lt.s32.totalorder %s192, 15
      %s194 = scalar_select %p193, %s192, 15
      %s195 = smul.addr %s194, 8
      %s196 = scalar_lea.vmem %s4, %s195
      %s197 = smul.u32 8, %s16
      %p198 = scmp.lt.s32.totalorder %s197, 15
      %s199 = scalar_select %p198, %s197, 15
      %s200 = smul.addr %s199, 8
      %s201 = scalar_lea.vmem %s0, %s200
      %s202 = smul.u32 8, %s16
      %s203 = smul.u32 8, %s16
      %p204 = scmp.lt.s32.totalorder %s203, 15
      %s205 = scalar_select %p204, %s203, 15
      %s206 = smul.addr %s205, 8
      %s207 = scalar_lea.vmem %s3, %s206
      %s208 = smul.u32 8, %s16
      %s209 = smul.u32 8, %s16
      %p210 = scmp.lt.s32.totalorder %s209, 15
      %s211 = scalar_select %p210, %s209, 15
      %s212 = smul.addr %s211, 8
      %s213 = scalar_lea.vmem %s4, %s212
      %s214 = smul.u32 8, %s16
      %v215 = vld [vmem:[%s201] sm:$0xff]
      %v216 = vld [vmem:[%s201 + $0x8] sm:$0xff]
      %v217 = vld [vmem:[%s201 + $0x10] sm:$0xff]
      %v218 = vld [vmem:[%s201 + $0x18] sm:$0xff]
      %v219 = vld [vmem:[%s201 + $0x20] sm:$0xff]
      %v220 = vld [vmem:[%s201 + $0x28] sm:$0xff]
      %v221 = vld [vmem:[%s201 + $0x30] sm:$0xff]
      %v222 = vld [vmem:[%s201 + $0x38] sm:$0xff]
      %v223 = vld [vmem:[%s1] sm:$0xff]
      %vm224 = vcmask 64512
      %v226 = vsel %vm224, %v215, 0
      %v229 = vsel %vm224, %v216, 0
      %v232 = vsel %vm224, %v217, 0
      %v235 = vsel %vm224, %v218, 0
      %v238 = vsel %vm224, %v219, 0
      %v241 = vsel %vm224, %v220, 0
      %v244 = vsel %vm224, %v221, 0
      %v247 = vsel %vm224, %v222, 0
      %249 = vmatprep.subr.mxu0 0.0
      %250 = vmatpush1.msra.mxu0 %v223
      %251 = vmatprep.subr.mxu0 0.0
      %252 = vmatpush1.msra.mxu0 0.0
      %253 = vmatprep.subr.mxu0 0.0
      %254 = vmatpush1.msra.mxu0 0.0
      %255 = vmatprep.subr.mxu0 0.0
      %256 = vmatpush1.msra.mxu0 0.0
      %257 = vmatprep.subr.mxu0 0.0
      %258 = vmatpush1.msra.mxu0 0.0
      %259 = vmatprep.subr.mxu0 0.0
      %260 = vmatpush1.msra.mxu0 0.0
      %261 = vmatprep.subr.mxu0 0.0
      %262 = vmatpush1.msra.mxu0 0.0
      %263 = vmatprep.subr.mxu0 0.0
      %264 = vmatpush1.msra.mxu0 0.0
      %265 = vmatprep.subr.mxu0 0.0
      %266 = vmatpush1.msra.mxu0 0.0
      %267 = vmatprep.subr.mxu0 0.0
      %268 = vmatpush1.msra.mxu0 0.0
      %269 = vmatprep.subr.mxu0 0.0
      %270 = vmatpush1.msra.mxu0 0.0
      %271 = vmatprep.subr.mxu0 0.0
      %272 = vmatpush1.msra.mxu0 0.0
      %273 = vmatprep.subr.mxu0 0.0
      %274 = vmatpush1.msra.mxu0 0.0
      %275 = vmatprep.subr.mxu0 0.0
      %276 = vmatpush1.msra.mxu0 0.0
      %277 = vmatprep.subr.mxu0 0.0
      %278 = vmatpush1.msra.mxu0 0.0
      %279 = vmatprep.subr.mxu0 0.0
      %280 = vmatpush1.msra.mxu0 0.0
      %281 = vmatprep.subr.mxu0 0.0
      %282 = vmatpush1.msra.mxu0 0.0
      %283 = vmatprep.subr.mxu0 0.0
      %284 = vmatpush1.msra.mxu0 0.0
      %285 = vmatprep.subr.mxu0 0.0
      %286 = vmatpush1.msra.mxu0 0.0
      %287 = vmatprep.subr.mxu0 0.0
      %288 = vmatpush1.msra.mxu0 0.0
      %289 = vmatprep.subr.mxu0 0.0
      %290 = vmatpush1.msra.mxu0 0.0
      %291 = vmatprep.subr.mxu0 0.0
      %292 = vmatpush1.msra.mxu0 0.0
      %293 = vmatprep.subr.mxu0 0.0
      %294 = vmatpush1.msra.mxu0 0.0
      %295 = vmatprep.subr.mxu0 0.0
      %296 = vmatpush1.msra.mxu0 0.0
      %297 = vmatprep.subr.mxu0 0.0
      %298 = vmatpush1.msra.mxu0 0.0
      %299 = vmatprep.subr.mxu0 0.0
      %300 = vmatpush1.msra.mxu0 0.0
      %301 = vmatprep.subr.mxu0 0.0
      %302 = vmatpush1.msra.mxu0 0.0
      %303 = vmatprep.subr.mxu0 0.0
      %304 = vmatpush1.msra.mxu0 0.0
      %305 = vmatprep.subr.mxu0 0.0
      %306 = vmatpush1.msra.mxu0 0.0
      %307 = vmatprep.subr.mxu0 0.0
      %308 = vmatpush1.msra.mxu0 0.0
      %309 = vmatprep.subr.mxu0 0.0
      %310 = vmatpush1.msra.mxu0 0.0
      %311 = vmatprep.subr.mxu0 0.0
      %312 = vmatpush1.msra.mxu0 0.0
      %313 = vmatprep.mubr.f32.mxu0 0.0
      %314 = vmatmul.mubr.f32.gmra.mrb[0].mxu0 %v226
      %v315 = vpop.f32.mrb[0].mxu0
      %v316 = vadd.f32 0.0, %v315
      %v317 = vpop.f32.mrb[0].mxu0
      %318 = vmatprep.mubr.f32.mxu0 0.0
      %319 = vmatmul.mubr.f32.gmra.mrb[0].mxu0 %v229
      %v320 = vpop.f32.mrb[0].mxu0
      %v321 = vadd.f32 0.0, %v320
      %v322 = vpop.f32.mrb[0].mxu0
      %323 = vmatprep.mubr.f32.mxu0 0.0
      %324 = vmatmul.mubr.f32.gmra.mrb[0].mxu0 %v232
      %v325 = vpop.f32.mrb[0].mxu0
      %v326 = vadd.f32 0.0, %v325
      %v327 = vpop.f32.mrb[0].mxu0
      %328 = vmatprep.mubr.f32.mxu0 0.0
      %329 = vmatmul.mubr.f32.gmra.mrb[0].mxu0 %v235
      %v330 = vpop.f32.mrb[0].mxu0
      %v331 = vadd.f32 0.0, %v330
      %v332 = vpop.f32.mrb[0].mxu0
      %333 = vmatprep.mubr.f32.mxu0 0.0
      %334 = vmatmul.mubr.f32.gmra.mrb[0].mxu0 %v238
      %v335 = vpop.f32.mrb[0].mxu0
      %v336 = vadd.f32 0.0, %v335
      %v337 = vpop.f32.mrb[0].mxu0
      %338 = vmatprep.mubr.f32.mxu0 0.0
      %339 = vmatmul.mubr.f32.gmra.mrb[0].mxu0 %v241
      %v340 = vpop.f32.mrb[0].mxu0
      %v341 = vadd.f32 0.0, %v340
      %v342 = vpop.f32.mrb[0].mxu0
      %343 = vmatprep.mubr.f32.mxu0 0.0
      %344 = vmatmul.mubr.f32.gmra.mrb[0].mxu0 %v244
      %v345 = vpop.f32.mrb[0].mxu0
      %v346 = vadd.f32 0.0, %v345
      %v347 = vpop.f32.mrb[0].mxu0
      %348 = vmatprep.mubr.f32.mxu0 0.0
      %349 = vmatmul.mubr.f32.gmra.mrb[0].mxu0 %v247
      %v350 = vpop.f32.mrb[0].mxu0
      %v351 = vadd.f32 0.0, %v350
      %v352 = vpop.f32.mrb[0].mxu0
      %353 = vdwg.mxu0
      %vm354 = vcmask 261120
      %355 = vst.msk [vmem:[%s207] sm:$0xff] %vm354, %v316
      %356 = vst.msk [vmem:[%s207 + $0x8] sm:$0xff] %vm354, %v321
      %357 = vst.msk [vmem:[%s207 + $0x10] sm:$0xff] %vm354, %v326
      %358 = vst.msk [vmem:[%s207 + $0x18] sm:$0xff] %vm354, %v331
      %359 = vst.msk [vmem:[%s207 + $0x20] sm:$0xff] %vm354, %v336
      %360 = vst.msk [vmem:[%s207 + $0x28] sm:$0xff] %vm354, %v341
      %361 = vst.msk [vmem:[%s207 + $0x30] sm:$0xff] %vm354, %v346
      %362 = vst.msk [vmem:[%s207 + $0x38] sm:$0xff] %vm354, %v351
      %v363 = vld [vmem:[%s2] sm:$0xff]
      %v364 = vld [vmem:[%s2 + $0x8] sm:$0xff]
      %v365 = vld [vmem:[%s2 + $0x10] sm:$0xff]
      %v366 = vld [vmem:[%s2 + $0x18] sm:$0xff]
      %v368 = vsel %vm354, %v316, 0
      %v371 = vsel %vm354, %v321, 0
      %v374 = vsel %vm354, %v326, 0
      %v377 = vsel %vm354, %v331, 0
      %v380 = vsel %vm354, %v336, 0
      %v383 = vsel %vm354, %v341, 0
      %v386 = vsel %vm354, %v346, 0
      %v389 = vsel %vm354, %v351, 0
      %391 = vmatprep.subr.mxu0 0.0
      %392 = vmatpush1.msra.mxu0 %v363
      %393 = vmatprep.subr.mxu0 0.0
      %394 = vmatpush1.msra.mxu0 %v364
      %395 = vmatprep.subr.mxu0 0.0
      %396 = vmatpush1.msra.mxu0 %v365
      %397 = vmatprep.subr.mxu0 0.0
      %398 = vmatpush1.msra.mxu0 %v366
      %399 = vmatprep.subr.mxu0 0.0
      %400 = vmatpush1.msra.mxu0 0.0
      %401 = vmatprep.subr.mxu0 0.0
      %402 = vmatpush1.msra.mxu0 0.0
      %403 = vmatprep.subr.mxu0 0.0
      %404 = vmatpush1.msra.mxu0 0.0
      %405 = vmatprep.subr.mxu0 0.0
      %406 = vmatpush1.msra.mxu0 0.0
      %407 = vmatprep.subr.mxu0 0.0
      %408 = vmatpush1.msra.mxu0 0.0
      %409 = vmatprep.subr.mxu0 0.0
      %410 = vmatpush1.msra.mxu0 0.0
      %411 = vmatprep.subr.mxu0 0.0
      %412 = vmatpush1.msra.mxu0 0.0
      %413 = vmatprep.subr.mxu0 0.0
      %414 = vmatpush1.msra.mxu0 0.0
      %415 = vmatprep.subr.mxu0 0.0
      %416 = vmatpush1.msra.mxu0 0.0
      %417 = vmatprep.subr.mxu0 0.0
      %418 = vmatpush1.msra.mxu0 0.0
      %419 = vmatprep.subr.mxu0 0.0
      %420 = vmatpush1.msra.mxu0 0.0
      %421 = vmatprep.subr.mxu0 0.0
      %422 = vmatpush1.msra.mxu0 0.0
      %423 = vmatprep.subr.mxu0 0.0
      %424 = vmatpush1.msra.mxu0 0.0
      %425 = vmatprep.subr.mxu0 0.0
      %426 = vmatpush1.msra.mxu0 0.0
      %427 = vmatprep.subr.mxu0 0.0
      %428 = vmatpush1.msra.mxu0 0.0
      %429 = vmatprep.subr.mxu0 0.0
      %430 = vmatpush1.msra.mxu0 0.0
      %431 = vmatprep.subr.mxu0 0.0
      %432 = vmatpush1.msra.mxu0 0.0
      %433 = vmatprep.subr.mxu0 0.0
      %434 = vmatpush1.msra.mxu0 0.0
      %435 = vmatprep.subr.mxu0 0.0
      %436 = vmatpush1.msra.mxu0 0.0
      %437 = vmatprep.subr.mxu0 0.0
      %438 = vmatpush1.msra.mxu0 0.0
      %439 = vmatprep.subr.mxu0 0.0
      %440 = vmatpush1.msra.mxu0 0.0
      %441 = vmatprep.subr.mxu0 0.0
      %442 = vmatpush1.msra.mxu0 0.0
      %443 = vmatprep.subr.mxu0 0.0
      %444 = vmatpush1.msra.mxu0 0.0
      %445 = vmatprep.subr.mxu0 0.0
      %446 = vmatpush1.msra.mxu0 0.0
      %447 = vmatprep.subr.mxu0 0.0
      %448 = vmatpush1.msra.mxu0 0.0
      %449 = vmatprep.subr.mxu0 0.0
      %450 = vmatpush1.msra.mxu0 0.0
      %451 = vmatprep.subr.mxu0 0.0
      %452 = vmatpush1.msra.mxu0 0.0
      %453 = vmatprep.subr.mxu0 0.0
      %454 = vmatpush1.msra.mxu0 0.0
      %455 = vmatprep.mubr.f32.mxu0 0.0
      %456 = vmatmul.mubr.f32.gmra.mrb[0].mxu0 %v368
      %v457 = vpop.f32.mrb[0].mxu0
      %v458 = vadd.f32 0.0, %v457
      %v459 = vpop.f32.mrb[0].mxu0
      %460 = vmatprep.mubr.f32.mxu0 0.0
      %461 = vmatmul.mubr.f32.gmra.mrb[0].mxu0 %v371
      %v462 = vpop.f32.mrb[0].mxu0
      %v463 = vadd.f32 0.0, %v462
      %v464 = vpop.f32.mrb[0].mxu0
      %465 = vmatprep.mubr.f32.mxu0 0.0
      %466 = vmatmul.mubr.f32.gmra.mrb[0].mxu0 %v374
      %v467 = vpop.f32.mrb[0].mxu0
      %v468 = vadd.f32 0.0, %v467
      %v469 = vpop.f32.mrb[0].mxu0
      %470 = vmatprep.mubr.f32.mxu0 0.0
      %471 = vmatmul.mubr.f32.gmra.mrb[0].mxu0 %v377
      %v472 = vpop.f32.mrb[0].mxu0
      %v473 = vadd.f32 0.0, %v472
      %v474 = vpop.f32.mrb[0].mxu0
      %475 = vmatprep.mubr.f32.mxu0 0.0
      %476 = vmatmul.mubr.f32.gmra.mrb[0].mxu0 %v380
      %v477 = vpop.f32.mrb[0].mxu0
      %v478 = vadd.f32 0.0, %v477
      %v479 = vpop.f32.mrb[0].mxu0
      %480 = vmatprep.mubr.f32.mxu0 0.0
      %481 = vmatmul.mubr.f32.gmra.mrb[0].mxu0 %v383
      %v482 = vpop.f32.mrb[0].mxu0
      %v483 = vadd.f32 0.0, %v482
      %v484 = vpop.f32.mrb[0].mxu0
      %485 = vmatprep.mubr.f32.mxu0 0.0
      %486 = vmatmul.mubr.f32.gmra.mrb[0].mxu0 %v386
      %v487 = vpop.f32.mrb[0].mxu0
      %v488 = vadd.f32 0.0, %v487
      %v489 = vpop.f32.mrb[0].mxu0
      %490 = vmatprep.mubr.f32.mxu0 0.0
      %491 = vmatmul.mubr.f32.gmra.mrb[0].mxu0 %v389
      %v492 = vpop.f32.mrb[0].mxu0
      %v493 = vadd.f32 0.0, %v492
      %v494 = vpop.f32.mrb[0].mxu0
      %495 = vdwg.mxu0
      %496 = vst.msk [vmem:[%s213] sm:$0xff] %vm224, %v458
      %497 = vst.msk [vmem:[%s213 + $0x8] sm:$0xff] %vm224, %v463
      %498 = vst.msk [vmem:[%s213 + $0x10] sm:$0xff] %vm224, %v468
      %499 = vst.msk [vmem:[%s213 + $0x18] sm:$0xff] %vm224, %v473
      %500 = vst.msk [vmem:[%s213 + $0x20] sm:$0xff] %vm224, %v478
      %501 = vst.msk [vmem:[%s213 + $0x28] sm:$0xff] %vm224, %v483
      %502 = vst.msk [vmem:[%s213 + $0x30] sm:$0xff] %vm224, %v488
      %503 = vst.msk [vmem:[%s213 + $0x38] sm:$0xff] %vm224, %v493
      %s504 = smul.u32 8, %s16
      %p505 = scmp.lt.s32.totalorder %s504, 15
      %s506 = scalar_select %p505, %s504, 15
      %s507 = smul.addr %s506, 8
      %s508 = scalar_lea.vmem %s3, %s507
      %s509 = smul.u32 8, %s16
      %p510 = scmp.lt.s32.totalorder %s509, 15
      %s511 = scalar_select %p510, %s509, 15
      %s512 = smul.addr %s511, 8
      %s513 = scalar_lea.vmem %s4, %s512
      // Predicated region
      $region33: #{tpu_custom_call.1} parent=31 // pred_check
        %p514 = pneg %p102
      $region34: #{tpu_custom_call.1} parent=31 // pred_check_branch
        %516 = sbr.rel (%p514) target = $region36
      $region35: #{tpu_custom_call.1} parent=31 // pred_region
        %s517 = smul.u32 8, %s16
      $region36: #{tpu_custom_call.1} parent=31 // pred_fallthru
        _
      // Predicated region
      $region37: #{tpu_custom_call.1} parent=31 // pred_check
        %p518 = pneg %p128
      $region38: #{tpu_custom_call.1} parent=31 // pred_check_branch
        %520 = sbr.rel (%p518) target = $region40
      $region39: #{tpu_custom_call.1} parent=31 // pred_region
        %s521 = smul.u32 8, %s16
      $region40: #{tpu_custom_call.1} parent=31 // pred_fallthru
        _
    $region32: #{tpu_custom_call.1} parent=5 // pred_fallthru
      _
    %p522 = scmp.le.s32.totalorder 2, %s11
    // Predicated region
    $region41: #{tpu_custom_call.1} parent=5 // pred_check
      %p523 = pneg %p522
    $region42: #{tpu_custom_call.1} parent=5 // pred_check_branch
      %525 = sbr.rel (%p523) target = $region44
    $region43: #{tpu_custom_call.1} parent=5 // pred_region
      %s526 = ssub.s32 %s11, 2
      // Predicated region
      $region45: #{tpu_custom_call.1} parent=43 // pred_check
        %p527 = pneg %p108
      $region46: #{tpu_custom_call.1} parent=43 // pred_check_branch
        %529 = sbr.rel (%p527) target = $region48
      $region47: #{tpu_custom_call.1} parent=43 // pred_region
        %s530 = smul.u32 8, %s17
        %p531 = scmp.lt.s32.totalorder %s530, 15
        %s532 = scalar_select %p531, %s530, 15
        %s533 = smul.addr %s532, 8
        %s534 = scalar_lea.vmem %s3, %s533
      $region48: #{tpu_custom_call.1} parent=43 // pred_fallthru
        _
      // Predicated region
      $region49: #{tpu_custom_call.1} parent=43 // pred_check
        %p535 = pneg %p134
      $region50: #{tpu_custom_call.1} parent=43 // pred_check_branch
        %537 = sbr.rel (%p535) target = $region52
      $region51: #{tpu_custom_call.1} parent=43 // pred_region
        %s538 = smul.u32 8, %s17
        %p539 = scmp.lt.s32.totalorder %s538, 15
        %s540 = scalar_select %p539, %s538, 15
        %s541 = smul.addr %s540, 8
        %s542 = scalar_lea.vmem %s4, %s541
      $region52: #{tpu_custom_call.1} parent=43 // pred_fallthru
        _
    $region44: #{tpu_custom_call.1} parent=5 // pred_fallthru
      _
  $region6: #{tpu_custom_call.1} parent=0 // loop_footer
    %s15 = sadd.s32 1, %s11
  $region7: #{tpu_custom_call.1} parent=0 // loop_footer_branch
    %10 = sbr.rel target = $region3
  $region8: #{tpu_custom_call.1} parent=0 // loop_exit
    _

</llo_original>
